<compile_context>
chip_gen: v7x
topology: tpu7x:2x2x1
jax: 0.10.0
libtpu: 0.0.40
codegen_flags: <defaults>
</compile_context>

<pallas_src>
import functools

import jax
import jax.numpy as jnp
from jax import lax
from jax.experimental import pallas as pl
from jax.experimental.pallas import tpu as pltpu

BN_EPS = 1e-5
LANE = 128
# 32 MiB scoped VMEM is safe on v5e/v6e (128 MiB physical) and v7x (64 MiB physical);
# the default tiles stay far under it.  On v5e/v6e, l_tile=1024-2048 with a higher
# limit pushes the streaming passes closer to the HBM roofline; keep 512/32MiB on v7x.
VMEM_LIMIT = 32 * 1024 * 1024


def _round_up(x, m):
    return (x + m - 1) // m * m


def _fill_im2col(a_scr, x_ref, halo_ref, kernel_size, c_in, l_tile):
    """Fill the (K*C_in, l_tile) bf16 VMEM scratch with A[k*C_in + c, l] = x_ext[c, l+k],
    sourcing the K-1 column halo from a second 128-lane view of the same input.
    Per-tap writes into a fixed scratch avoid the concat materialization of x_ext / A."""
    xt = x_ref[0]                                   # (C_in, l_tile) bf16
    a_scr[0:c_in, :] = xt
    if kernel_size > 1:
        ht = halo_ref[0]                            # (C_in, 128) bf16
        for kk in range(1, kernel_size):
            lo, hi = kk * c_in, (kk + 1) * c_in
            a_scr[lo:hi, 0:l_tile - kk] = xt[:, kk:]
            a_scr[lo:hi, l_tile - kk:] = ht[:, 0:kk]
    # TODO(synk): building the shifted taps with pltpu.roll (XLU slot) would remove the
    # lane-shift relayouts entirely; static slices kept for guaranteed correctness.


def conv_stats_kernel(x_ref, halo_ref, w_ref, stats_ref, a_scr, *,
                      kernel_size, c_in, l_tile, last_valid, has_pad):
    """Pass 1: conv tile (discarded) -> per-channel [sum, sum_sq], accumulated over the
    L-tile axis into a resident (1, C_out, 2) output block."""
    t = pl.program_id(1)

    @pl.when(t == 0)
    def _init():
        stats_ref[...] = jnp.zeros_like(stats_ref)

    _fill_im2col(a_scr, x_ref, halo_ref, kernel_size, c_in, l_tile)
    # Single wide MXU matmul: (C_out, K*C_in)bf16 @ (K*C_in, l_tile)bf16 -> f32.
    acc = jnp.dot(w_ref[...], a_scr[...], preferred_element_type=jnp.float32)

    if has_pad:
        is_last = t == pl.num_programs(1) - 1

        @pl.when(jnp.logical_not(is_last))
        def _interior():
            stats_ref[0, :, 0:1] += jnp.sum(acc, axis=-1, keepdims=True)
            stats_ref[0, :, 1:2] += jnp.sum(acc * acc, axis=-1, keepdims=True)

        @pl.when(is_last)
        def _last():
            # Only the last tile holds lane-padding columns; mask them out of the stats.
            col = lax.broadcasted_iota(jnp.int32, acc.shape, 1)
            am = jnp.where(col < last_valid, acc, 0.0)
            stats_ref[0, :, 0:1] += jnp.sum(am, axis=-1, keepdims=True)
            stats_ref[0, :, 1:2] += jnp.sum(am * am, axis=-1, keepdims=True)
    else:
        stats_ref[0, :, 0:1] += jnp.sum(acc, axis=-1, keepdims=True)
        stats_ref[0, :, 1:2] += jnp.sum(acc * acc, axis=-1, keepdims=True)


def conv_bn_act_kernel(x_ref, halo_ref, w_ref, scale_ref, bias_ref, o_ref, a_scr, *,
                       kernel_size, c_in, l_tile):
    """Pass 2: recompute the conv tile, normalize with precomputed per-channel
    scale/bias, ReLU6 (all non-MXU math in f32, lane-dense output store)."""
    _fill_im2col(a_scr, x_ref, halo_ref, kernel_size, c_in, l_tile)
    acc = jnp.dot(w_ref[...], a_scr[...], preferred_element_type=jnp.float32)
    o_ref[0] = jnp.clip(acc * scale_ref[...] + bias_ref[...], 0.0, 6.0)


def conv_block_1d(x, weight, *, l_tile=512):
    """x: (N, C_in, L) f32, weight: (C_out, C_in, K) f32  ->  (N, C_out, L) f32."""
    n, c_in, length = x.shape
    c_out, _, k = weight.shape
    assert k <= LANE + 1, "taps wider than the 128-lane halo block not supported"

    # Lane-dense tiling of the length axis.
    l_tile = min(l_tile, _round_up(length, LANE))
    n_tiles = pl.cdiv(_round_up(length, LANE), l_tile)
    l_out_pad = n_tiles * l_tile
    has_pad = l_out_pad != length
    last_valid = length - (n_tiles - 1) * l_tile     # valid columns in the last tile

    # 'same' padding (stride=1, PyTorch convention) + right pad to the tiled length plus
    # one extra 128-lane halo block.  MXU operands cast to bf16 here (halves input DMA).
    # TODO(synk): this pad+cast is one extra fused HBM round trip of x; folding the edge
    # handling into the kernel index_map would remove it.
    pad_left = (k - 1) // 2
    l_in_pad = l_out_pad + LANE
    x_padded = jnp.pad(
        x, ((0, 0), (0, 0), (pad_left, l_in_pad - length - pad_left))
    ).astype(jnp.bfloat16)

    # (C_out, C_in, K) -> (C_out, K*C_in), matching A[k*C_in + c, l] in the kernel.
    w2 = jnp.transpose(weight, (0, 2, 1)).reshape(c_out, k * c_in).astype(jnp.bfloat16)

    halo_stride = l_tile // LANE
    x_spec = pl.BlockSpec((1, c_in, l_tile), lambda b, t: (b, 0, t))
    halo_spec = pl.BlockSpec((1, c_in, LANE), lambda b, t: (b, 0, (t + 1) * halo_stride))
    w_spec = pl.BlockSpec((c_out, k * c_in), lambda b, t: (0, 0))
    scratch = [pltpu.VMEM((k * c_in, l_tile), jnp.bfloat16)]

    # ---- Pass 1: BatchNorm batch statistics (no conv intermediate stored to HBM). ----
    kernel1 = functools.partial(conv_stats_kernel, kernel_size=k, c_in=c_in,
                                l_tile=l_tile, last_valid=last_valid, has_pad=has_pad)
    stats = pl.pallas_call(
        kernel1,
        grid=(n, n_tiles),
        in_specs=[x_spec, halo_spec, w_spec],
        out_specs=pl.BlockSpec((1, c_out, 2), lambda b, t: (b, 0, 0)),
        out_shape=jax.ShapeDtypeStruct((n, c_out, 2), jnp.float32),
        scratch_shapes=scratch,
        compiler_params=pltpu.CompilerParams(
            dimension_semantics=("parallel", "arbitrary"),
            vmem_limit_bytes=VMEM_LIMIT),
    )(x_padded, x_padded, w2)

    # Tiny global reduction -> BatchNorm1d training-mode scale/bias (biased variance).
    # TODO(synk): E[x^2]-E[x]^2 in f32 can cancel for |mean| >> std at very large N*L;
    # a centered second stats pass would fix it at the cost of one more read of x.
    count = n * length
    totals = jnp.sum(stats, axis=0)                  # (C_out, 2)
    mean = totals[:, 0] / count
    var = jnp.maximum(totals[:, 1] / count - mean * mean, 0.0)
    inv_std = lax.rsqrt(var + BN_EPS)
    scale = inv_std.reshape(c_out, 1).astype(jnp.float32)
    bias = (-mean * inv_std).reshape(c_out, 1).astype(jnp.float32)

    # ---- Pass 2: recompute conv + normalize + ReLU6, lane-dense f32 output. ----
    kernel2 = functools.partial(conv_bn_act_kernel, kernel_size=k, c_in=c_in,
                                l_tile=l_tile)
    out = pl.pallas_call(
        kernel2,
        grid=(n, n_tiles),
        in_specs=[x_spec, halo_spec, w_spec,
                  pl.BlockSpec((c_out, 1), lambda b, t: (0, 0)),
                  pl.BlockSpec((c_out, 1), lambda b, t: (0, 0))],
        out_specs=pl.BlockSpec((1, c_out, l_tile), lambda b, t: (b, 0, t)),
        out_shape=jax.ShapeDtypeStruct((n, c_out, l_out_pad), jnp.float32),
        scratch_shapes=scratch,
        compiler_params=pltpu.CompilerParams(
            dimension_semantics=("parallel", "parallel"),
            vmem_limit_bytes=VMEM_LIMIT),
    )(x_padded, x_padded, w2, scale, bias)

    return out[:, :, :length]


def _reference(x, weight):
    """Pure-JAX reference. Conv operands rounded to bf16 to mirror the MXU fast path
    (accumulation and all BN/ReLU6 math in f32, matching the kernel)."""
    k = weight.shape[-1]
    pad_left = (k - 1) // 2
    xb = x.astype(jnp.bfloat16).astype(jnp.float32)
    wb = weight.astype(jnp.bfloat16).astype(jnp.float32)
    conv = lax.conv_general_dilated(
        xb, wb, window_strides=(1,),
        padding=[(pad_left, k - 1 - pad_left)],
        dimension_numbers=('NCH', 'OIH', 'NCH'))
    mean = jnp.mean(conv, axis=(0, 2), keepdims=True)
    var = jnp.mean((conv - mean) ** 2, axis=(0, 2), keepdims=True)
    return jnp.clip((conv - mean) * lax.rsqrt(var + BN_EPS), 0.0, 6.0)


if __name__ == "__main__":
    # Small shapes consistent with Conv1d forward: (batch, in_channels, length)
    N, C_IN, C_OUT, L, K = 2, 4, 8, 16, 3

    key = jax.random.PRNGKey(0)
    kx, kw = jax.random.split(key)
    x = jax.random.normal(kx, (N, C_IN, L), dtype=jnp.float32)
    # Deterministic kaiming-uniform-ish init for Conv1d weight (bias=False)
    fan_in = C_IN * K
    bound = 1.0 / (fan_in ** 0.5)
    weight = jax.random.uniform(kw, (C_OUT, C_IN, K), dtype=jnp.float32,
                                minval=-bound, maxval=bound)

    out = jax.block_until_ready(conv_block_1d(x, weight))
    ref = _reference(x, weight)

    assert out.shape == (N, C_OUT, L)
    assert jnp.allclose(out, ref, atol=1e-2, rtol=1e-2)

    print("KERNEL_OK")
</pallas_src>

<mosaic_0001>
module attributes {stable_mosaic.version = 11 : i64} {
  func.func @conv_stats_kernel(%arg0: i32, %arg1: i32, %arg2: memref<1x4x128xbf16, #tpu.memory_space<vmem>>, %arg3: memref<1x4x128xbf16, #tpu.memory_space<vmem>>, %arg4: memref<8x12xbf16, #tpu.memory_space<vmem>>, %arg5: memref<1x8x2xf32, #tpu.memory_space<vmem>>, %arg6: memref<12x128xbf16, #tpu.memory_space<vmem>>) attributes {dimension_semantics = [#tpu.dimension_semantics<parallel>, #tpu.dimension_semantics<arbitrary>], iteration_bounds = array<i64: 2, 1>, scalar_prefetch = 0 : i64, scratch_operands = 1 : i64, tpu.core_type = #tpu.core_type<tc>, window_params = [{transform_indices = @transform_0, window_bounds = array<i64: 1, 4, 128>}, {transform_indices = @transform_1, window_bounds = array<i64: 1, 4, 128>}, {pipeline_mode = #tpu.pipeline_mode<synchronous>, transform_indices = @transform_2, window_bounds = array<i64: 8, 12>}, {transform_indices = @transform_3, window_bounds = array<i64: 1, 8, 2>}]} {
    %c0_i32 = arith.constant 0 : i32
    %0 = arith.cmpi eq, %arg1, %c0_i32 : i32
    %1 = arith.extui %0 : i1 to i32
    %c0_i32_0 = arith.constant 0 : i32
    %2 = arith.cmpi ne, %1, %c0_i32_0 : i32
    scf.if %2 {
      %cst_19 = arith.constant 0.000000e+00 : f32
      %25 = vector.broadcast %cst_19 : f32 to vector<1x8x2xf32>
      %c0_20 = arith.constant 0 : index
      %c0_21 = arith.constant 0 : index
      %c0_22 = arith.constant 0 : index
      %26 = vector.load %arg5[%c0_20, %c0_21, %c0_22] : memref<1x8x2xf32, #tpu.memory_space<vmem>>, vector<1x8x2xf32>
      tpu.vector_store %arg5[%c0_20, %c0_21, %c0_22], %25 {strides = array<i32>} : memref<1x8x2xf32, #tpu.memory_space<vmem>>, vector<1x8x2xf32>,
    } else {
    }
    %c0 = arith.constant 0 : index
    %c0_1 = arith.constant 0 : index
    %c0_2 = arith.constant 0 : index
    %3 = vector.load %arg2[%c0, %c0_1, %c0_2] : memref<1x4x128xbf16, #tpu.memory_space<vmem>>, vector<1x4x128xbf16>
    %4 = vector.shape_cast %3 : vector<1x4x128xbf16> to vector<4x128xbf16>
    %c0_3 = arith.constant 0 : index
    %c0_4 = arith.constant 0 : index
    %5 = vector.load %arg6[%c0_3, %c0_4] : memref<12x128xbf16, #tpu.memory_space<vmem>>, vector<4x128xbf16>
    tpu.vector_store %arg6[%c0_3, %c0_4], %4 {strides = array<i32>} : memref<12x128xbf16, #tpu.memory_space<vmem>>, vector<4x128xbf16>,
    %c0_5 = arith.constant 0 : index
    %c0_6 = arith.constant 0 : index
    %c0_7 = arith.constant 0 : index
    %6 = vector.load %arg3[%c0_5, %c0_6, %c0_7] : memref<1x4x128xbf16, #tpu.memory_space<vmem>>, vector<1x4x128xbf16>
    %7 = vector.shape_cast %6 : vector<1x4x128xbf16> to vector<4x128xbf16>
    %8 = vector.extract_strided_slice %4 {offsets = [0, 1], sizes = [4, 127], strides = [1, 1]} : vector<4x128xbf16> to vector<4x127xbf16>
    %c4 = arith.constant 4 : index
    %c0_8 = arith.constant 0 : index
    %9 = vector.load %arg6[%c4, %c0_8] : memref<12x128xbf16, #tpu.memory_space<vmem>>, vector<4x127xbf16>
    tpu.vector_store %arg6[%c4, %c0_8], %8 {strides = array<i32>} : memref<12x128xbf16, #tpu.memory_space<vmem>>, vector<4x127xbf16>,
    %10 = vector.extract_strided_slice %7 {offsets = [0, 0], sizes = [4, 1], strides = [1, 1]} : vector<4x128xbf16> to vector<4x1xbf16>
    %c4_9 = arith.constant 4 : index
    %c127 = arith.constant 127 : index
    %11 = vector.load %arg6[%c4_9, %c127] : memref<12x128xbf16, #tpu.memory_space<vmem>>, vector<4x1xbf16>
    tpu.vector_store %arg6[%c4_9, %c127], %10 {strides = array<i32>} : memref<12x128xbf16, #tpu.memory_space<vmem>>, vector<4x1xbf16>,
    %12 = vector.extract_strided_slice %4 {offsets = [0, 2], sizes = [4, 126], strides = [1, 1]} : vector<4x128xbf16> to vector<4x126xbf16>
    %c8 = arith.constant 8 : index
    %c0_10 = arith.constant 0 : index
    %13 = vector.load %arg6[%c8, %c0_10] : memref<12x128xbf16, #tpu.memory_space<vmem>>, vector<4x126xbf16>
    tpu.vector_store %arg6[%c8, %c0_10], %12 {strides = array<i32>} : memref<12x128xbf16, #tpu.memory_space<vmem>>, vector<4x126xbf16>,
    %14 = vector.extract_strided_slice %7 {offsets = [0, 0], sizes = [4, 2], strides = [1, 1]} : vector<4x128xbf16> to vector<4x2xbf16>
    %c8_11 = arith.constant 8 : index
    %c126 = arith.constant 126 : index
    %15 = vector.load %arg6[%c8_11, %c126] : memref<12x128xbf16, #tpu.memory_space<vmem>>, vector<4x2xbf16>
    tpu.vector_store %arg6[%c8_11, %c126], %14 {strides = array<i32>} : memref<12x128xbf16, #tpu.memory_space<vmem>>, vector<4x2xbf16>,
    %c0_12 = arith.constant 0 : index
    %c0_13 = arith.constant 0 : index
    %16 = vector.load %arg4[%c0_12, %c0_13] : memref<8x12xbf16, #tpu.memory_space<vmem>>, vector<8x12xbf16>
    %c0_14 = arith.constant 0 : index
    %c0_15 = arith.constant 0 : index
    %17 = vector.load %arg6[%c0_14, %c0_15] : memref<12x128xbf16, #tpu.memory_space<vmem>>, vector<12x128xbf16>
    %cst = arith.constant dense<0.000000e+00> : vector<8x128xf32>
    %18 = tpu.matmul %16, %17, %cst {dimension_numbers = #tpu.dot_dimension_numbers<[1], [0], [0], [1], [0, 0, 1, 1], [], []>} : vector<8x12xbf16>, vector<12x128xbf16>, vector<8x128xf32> -> vector<8x128xf32>
    %c0_i32_16 = arith.constant 0 : i32
    %19 = arith.cmpi eq, %arg1, %c0_i32_16 : i32
    %true = arith.constant true
    %20 = arith.xori %19, %true : i1
    %21 = arith.extui %20 : i1 to i32
    %c0_i32_17 = arith.constant 0 : i32
    %22 = arith.cmpi ne, %21, %c0_i32_17 : i32
    scf.if %22 {
      %c0_19 = arith.constant 0 : index
      %c0_20 = arith.constant 0 : index
      %c0_21 = arith.constant 0 : index
      %25 = vector.load %arg5[%c0_19, %c0_20, %c0_21] : memref<1x8x2xf32, #tpu.memory_space<vmem>>, vector<1x8x1xf32>
      %26 = vector.shape_cast %25 : vector<1x8x1xf32> to vector<8x1xf32>
      %cst_22 = arith.constant dense<0.000000e+00> : vector<8xf32>
      %27 = vector.multi_reduction <add>, %18, %cst_22 [1] : vector<8x128xf32> to vector<8xf32>
      %28 = vector.shape_cast %27 : vector<8xf32> to vector<8x1xf32>
      %29 = arith.addf %26, %28 : vector<8x1xf32>
      %c0_23 = arith.constant 0 : index
      %c0_24 = arith.constant 0 : index
      %c0_25 = arith.constant 0 : index
      %30 = vector.load %arg5[%c0_23, %c0_24, %c0_25] : memref<1x8x2xf32, #tpu.memory_space<vmem>>, vector<1x8x1xf32>
      %31 = vector.shape_cast %30 : vector<1x8x1xf32> to vector<8x1xf32>
      %32 = vector.shape_cast %29 : vector<8x1xf32> to vector<1x8x1xf32>
      tpu.vector_store %arg5[%c0_23, %c0_24, %c0_25], %32 {strides = array<i32>} : memref<1x8x2xf32, #tpu.memory_space<vmem>>, vector<1x8x1xf32>,
      %c0_26 = arith.constant 0 : index
      %c0_27 = arith.constant 0 : index
      %c1 = arith.constant 1 : index
      %33 = vector.load %arg5[%c0_26, %c0_27, %c1] : memref<1x8x2xf32, #tpu.memory_space<vmem>>, vector<1x8x1xf32>
      %34 = vector.shape_cast %33 : vector<1x8x1xf32> to vector<8x1xf32>
      %35 = arith.mulf %18, %18 : vector<8x128xf32>
      %cst_28 = arith.constant dense<0.000000e+00> : vector<8xf32>
      %36 = vector.multi_reduction <add>, %35, %cst_28 [1] : vector<8x128xf32> to vector<8xf32>
      %37 = vector.shape_cast %36 : vector<8xf32> to vector<8x1xf32>
      %38 = arith.addf %34, %37 : vector<8x1xf32>
      %c0_29 = arith.constant 0 : index
      %c0_30 = arith.constant 0 : index
      %c1_31 = arith.constant 1 : index
      %39 = vector.load %arg5[%c0_29, %c0_30, %c1_31] : memref<1x8x2xf32, #tpu.memory_space<vmem>>, vector<1x8x1xf32>
      %40 = vector.shape_cast %39 : vector<1x8x1xf32> to vector<8x1xf32>
      %41 = vector.shape_cast %38 : vector<8x1xf32> to vector<1x8x1xf32>
      tpu.vector_store %arg5[%c0_29, %c0_30, %c1_31], %41 {strides = array<i32>} : memref<1x8x2xf32, #tpu.memory_space<vmem>>, vector<1x8x1xf32>,
    } else {
    }
    %23 = arith.extui %19 : i1 to i32
    %c0_i32_18 = arith.constant 0 : i32
    %24 = arith.cmpi ne, %23, %c0_i32_18 : i32
    scf.if %24 {
      %25 = tpu.iota {dimensions = array<i32: 1>} : vector<8x128xi32>
      %c16_i32 = arith.constant 16 : i32
      %26 = vector.broadcast %c16_i32 : i32 to vector<8x128xi32>
      %27 = arith.cmpi slt, %25, %26 : vector<8x128xi32>
      %cst_19 = arith.constant 0.000000e+00 : f32
      %28 = vector.broadcast %cst_19 : f32 to vector<8x128xf32>
      %29 = arith.select %27, %18, %28 : vector<8x128xi1>, vector<8x128xf32>
      %c0_20 = arith.constant 0 : index
      %c0_21 = arith.constant 0 : index
      %c0_22 = arith.constant 0 : index
      %30 = vector.load %arg5[%c0_20, %c0_21, %c0_22] : memref<1x8x2xf32, #tpu.memory_space<vmem>>, vector<1x8x1xf32>
      %31 = vector.shape_cast %30 : vector<1x8x1xf32> to vector<8x1xf32>
      %cst_23 = arith.constant dense<0.000000e+00> : vector<8xf32>
      %32 = vector.multi_reduction <add>, %29, %cst_23 [1] : vector<8x128xf32> to vector<8xf32>
      %33 = vector.shape_cast %32 : vector<8xf32> to vector<8x1xf32>
      %34 = arith.addf %31, %33 : vector<8x1xf32>
      %c0_24 = arith.constant 0 : index
      %c0_25 = arith.constant 0 : index
      %c0_26 = arith.constant 0 : index
      %35 = vector.load %arg5[%c0_24, %c0_25, %c0_26] : memref<1x8x2xf32, #tpu.memory_space<vmem>>, vector<1x8x1xf32>
      %36 = vector.shape_cast %35 : vector<1x8x1xf32> to vector<8x1xf32>
      %37 = vector.shape_cast %34 : vector<8x1xf32> to vector<1x8x1xf32>
      tpu.vector_store %arg5[%c0_24, %c0_25, %c0_26], %37 {strides = array<i32>} : memref<1x8x2xf32, #tpu.memory_space<vmem>>, vector<1x8x1xf32>,
      %c0_27 = arith.constant 0 : index
      %c0_28 = arith.constant 0 : index
      %c1 = arith.constant 1 : index
      %38 = vector.load %arg5[%c0_27, %c0_28, %c1] : memref<1x8x2xf32, #tpu.memory_space<vmem>>, vector<1x8x1xf32>
      %39 = vector.shape_cast %38 : vector<1x8x1xf32> to vector<8x1xf32>
      %40 = arith.mulf %29, %29 : vector<8x128xf32>
      %cst_29 = arith.constant dense<0.000000e+00> : vector<8xf32>
      %41 = vector.multi_reduction <add>, %40, %cst_29 [1] : vector<8x128xf32> to vector<8xf32>
      %42 = vector.shape_cast %41 : vector<8xf32> to vector<8x1xf32>
      %43 = arith.addf %39, %42 : vector<8x1xf32>
      %c0_30 = arith.constant 0 : index
      %c0_31 = arith.constant 0 : index
      %c1_32 = arith.constant 1 : index
      %44 = vector.load %arg5[%c0_30, %c0_31, %c1_32] : memref<1x8x2xf32, #tpu.memory_space<vmem>>, vector<1x8x1xf32>
      %45 = vector.shape_cast %44 : vector<1x8x1xf32> to vector<8x1xf32>
      %46 = vector.shape_cast %43 : vector<8x1xf32> to vector<1x8x1xf32>
      tpu.vector_store %arg5[%c0_30, %c0_31, %c1_32], %46 {strides = array<i32>} : memref<1x8x2xf32, #tpu.memory_space<vmem>>, vector<1x8x1xf32>,
    } else {
    }
    return
  }
  func.func @transform_0(%arg0: i32, %arg1: i32) -> (i32, i32, i32) {
    %c0_i32 = arith.constant 0 : i32
    %c0_i32_0 = arith.constant 0 : i32
    return %arg0, %c0_i32, %arg1 : i32, i32, i32
  }
  func.func @transform_1(%arg0: i32, %arg1: i32) -> (i32, i32, i32) {
    %c1_i32 = arith.constant 1 : i32
    %0 = arith.addi %arg1, %c1_i32 : i32
    %c1_i32_0 = arith.constant 1 : i32
    %1 = arith.muli %0, %c1_i32_0 : i32
    %c0_i32 = arith.constant 0 : i32
    %c0_i32_1 = arith.constant 0 : i32
    return %arg0, %c0_i32, %1 : i32, i32, i32
  }
  func.func @transform_2(%arg0: i32, %arg1: i32) -> (i32, i32) {
    %c0_i32 = arith.constant 0 : i32
    %c0_i32_0 = arith.constant 0 : i32
    %c0_i32_1 = arith.constant 0 : i32
    return %c0_i32, %c0_i32_0 : i32, i32
  }
  func.func @transform_3(%arg0: i32, %arg1: i32) -> (i32, i32, i32) {
    %c0_i32 = arith.constant 0 : i32
    %c0_i32_0 = arith.constant 0 : i32
    %c0_i32_1 = arith.constant 0 : i32
    return %arg0, %c0_i32, %c0_i32_0 : i32, i32, i32
  }
}

</mosaic_0001>

<llo_original>
// kernel: tpu_custom_call.1
$region0: #{tpu_custom_call.1}
  #allocation0 [shape = 'u32[]', space=smem, size = 0x4, offset = 0x4, fixed_abs, tag = 'smem constant byte address 0x4 - core index']
  #allocation1 [shape = 'u32[144,128]{1,0:T(1,128)}', space=vmem, size = 0x12000, scoped, tag = 'internal scratch']
  #allocation2 [shape = 'bf16[12,128]{1,0:T(8,128)(2,1)}', space=vmem, size = 0x1000, scoped, tag = 'scratch operand']
  %s0 = inlined_call_operand.hbm [shape: bf16[2,4,256], index: 0, kind: input, shape index: {}]
  %s1 = inlined_call_operand.hbm [shape: bf16[2,4,256], index: 1, kind: input, shape index: {}]
  %s2 = inlined_call_operand.vmem [shape: bf16[8,12], index: 2, kind: input, shape index: {}]
  %s3 = inlined_call_operand.vmem [shape: f32[2,8,2], index: 3, kind: output, shape index: {}]
  %s4 = sld [smem:[#allocation0]]
  $region65: #{tpu_custom_call.1} parent=0
    _
  %s6 = ssub.s32 1, %s4
  %s7 = scalar_select 0, %s6, %s4
  $region1: #{tpu_custom_call.1} parent=0
    #allocation3 [shape = 'u8[2048]{0}', space=vmem, size = 0x800, scoped, tag = 'input window, operand 0']
    #allocation4 [shape = 's32[2]{0}', space=sflag, size = 0x8, scoped, tag = 'scoped memory for tpu_custom_call.1']
    #allocation5 [shape = 'u8[2048]{0}', space=vmem, size = 0x800, scoped, tag = 'input window, operand 1']
    #allocation6 [shape = 's32[2]{0}', space=sflag, size = 0x8, scoped, tag = 'scoped memory for tpu_custom_call.1']
    %8 = vsyncpa [#allocation4], 0
    %s9 = scalar_lea.sflag [#allocation4], 1
    %10 = vsyncpa %s9, 0
    %11 = vsyncpa [#allocation6], 0
    %s12 = scalar_lea.sflag [#allocation6], 1
    %13 = vsyncpa %s12, 0
    loop: start=0, step=1, limit=4
    $region2: #{tpu_custom_call.1} parent=1 // loop_pre_header
      _
    $region3: #{tpu_custom_call.1} parent=1 // loop_header
      %s15 = sphi 0, %s19
      %p16 = scmp.ge.s32.totalorder %s15, 4
      %s22 = sphi 0, %s34
      %s23 = sphi 0, %s30
      %s24 = sphi 0, %s22
      %s25 = sphi 0, %s23
      %s26 = sphi 0, %s24
      %s27 = sphi 0, %s25
      %s39 = sphi 0, %s41
      %s42 = sphi 0, %s39
      %s43 = sphi 0, %s42
      %s59 = sphi 0, %s43
      %s69 = sphi 0, %s71
      %s72 = sphi 0, %s69
      %s73 = sphi 0, %s72
      %s89 = sphi 0, %s73
      %s93 = sphi 0, %s93
      %s95 = sphi 0, %s93
      %s96 = sphi 0, %s95
      %s110 = sphi 0, %s96
      %s116 = sphi 0, %s118
      %s119 = sphi 0, %s116
      %s120 = sphi 0, %s119
      %s136 = sphi 0, %s120
    $region4: #{tpu_custom_call.1} parent=1 // loop_header_branch
      %18 = sbr.rel (%p16) target = $region8
    $region5: #{tpu_custom_call.1} parent=1 // loop_body
      %s20 = ssub.s32 %s15, 1
      %s21 = ssub.s32 %s15, 2
      %s28 = sadd.s32 1, %s23
      %p29 = scmp.ge.s32.totalorder %s28, 1
      %s30 = scalar_select %p29, 0, %s28
      %s31 = sadd.s32 1, %s22
      %s32 = scalar_select %p29, %s31, %s22
      %p33 = scmp.ge.s32.totalorder %s32, 2
      %s34 = scalar_select %p33, 0, %s32
      %s35 = ssub.s32 %s22, %s34
      %s36 = ssub.s32 %s23, %s30
      %s37 = sor.u32 %s35, %s36
      %p38 = scmp.eq.s32.totalorder %s37, 0
      %s40 = sadd.s32 %s39, 1
      %s41 = scalar_select %p38, %s39, %s40
      %p44 = pneg %p38
      %p45 = scmp.eq.s32.totalorder %s15, 1
      %p46 = por %p44, %p45
      %p47 = scmp.ne.s32.totalorder %s39, %s42
      %p48 = scmp.eq.s32.totalorder %s15, 0
      %p49 = por %p47, %p48
      %p50 = scmp.ne.s32.totalorder %s39, %s42
      %p51 = scmp.eq.s32.totalorder %s20, 1
      %p52 = por %p50, %p51
      %p53 = scmp.ne.s32.totalorder %s42, %s43
      %p54 = scmp.eq.s32.totalorder %s20, 0
      %p55 = por %p53, %p54
      %p56 = scmp.ne.s32.totalorder %s42, %s43
      %p57 = scmp.eq.s32.totalorder %s21, 1
      %p58 = por %p56, %p57
      %p60 = scmp.ne.s32.totalorder %s43, %s59
      %p61 = scmp.eq.s32.totalorder %s21, 0
      %p62 = por %p60, %p61
      %s63 = sadd.s32 %s23, 1
      %s64 = sadd.s32 %s30, 1
      %s65 = ssub.s32 %s22, %s34
      %s66 = ssub.s32 %s63, %s64
      %s67 = sor.u32 %s65, %s66
      %p68 = scmp.eq.s32.totalorder %s67, 0
      %s70 = sadd.s32 %s69, 1
      %s71 = scalar_select %p68, %s69, %s70
      %p74 = pneg %p68
      %p75 = scmp.eq.s32.totalorder %s15, 1
      %p76 = por %p74, %p75
      %p77 = scmp.ne.s32.totalorder %s69, %s72
      %p78 = scmp.eq.s32.totalorder %s15, 0
      %p79 = por %p77, %p78
      %p80 = scmp.ne.s32.totalorder %s69, %s72
      %p81 = scmp.eq.s32.totalorder %s20, 1
      %p82 = por %p80, %p81
      %p83 = scmp.ne.s32.totalorder %s72, %s73
      %p84 = scmp.eq.s32.totalorder %s20, 0
      %p85 = por %p83, %p84
      %p86 = scmp.ne.s32.totalorder %s72, %s73
      %p87 = scmp.eq.s32.totalorder %s21, 1
      %p88 = por %p86, %p87
      %p90 = scmp.ne.s32.totalorder %s73, %s89
      %p91 = scmp.eq.s32.totalorder %s21, 0
      %p92 = por %p90, %p91
      %s94 = sadd.s32 %s93, 1
      %p97 = scmp.eq.s32.totalorder %s15, 1
      %p98 = scmp.ne.s32.totalorder %s93, %s95
      %p99 = scmp.eq.s32.totalorder %s15, 0
      %p100 = por %p98, %p99
      %p101 = scmp.ne.s32.totalorder %s93, %s95
      %p102 = scmp.eq.s32.totalorder %s20, 1
      %p103 = por %p101, %p102
      %p104 = scmp.ne.s32.totalorder %s95, %s96
      %p105 = scmp.eq.s32.totalorder %s20, 0
      %p106 = por %p104, %p105
      %p107 = scmp.ne.s32.totalorder %s95, %s96
      %p108 = scmp.eq.s32.totalorder %s21, 1
      %p109 = por %p107, %p108
      %p111 = scmp.ne.s32.totalorder %s96, %s110
      %p112 = scmp.eq.s32.totalorder %s21, 0
      %p113 = por %p111, %p112
      %s114 = ssub.s32 %s22, %s34
      %p115 = scmp.eq.s32.totalorder %s114, 0
      %s117 = sadd.s32 %s116, 1
      %s118 = scalar_select %p115, %s116, %s117
      %p121 = pneg %p115
      %p122 = scmp.eq.s32.totalorder %s15, 1
      %p123 = por %p121, %p122
      %p124 = scmp.ne.s32.totalorder %s116, %s119
      %p125 = scmp.eq.s32.totalorder %s15, 0
      %p126 = por %p124, %p125
      %p127 = scmp.ne.s32.totalorder %s116, %s119
      %p128 = scmp.eq.s32.totalorder %s20, 1
      %p129 = por %p127, %p128
      %p130 = scmp.ne.s32.totalorder %s119, %s120
      %p131 = scmp.eq.s32.totalorder %s20, 0
      %p132 = por %p130, %p131
      %p133 = scmp.ne.s32.totalorder %s119, %s120
      %p134 = scmp.eq.s32.totalorder %s21, 1
      %p135 = por %p133, %p134
      %p137 = scmp.ne.s32.totalorder %s120, %s136
      %p138 = scmp.eq.s32.totalorder %s21, 0
      %p139 = por %p137, %p138
      %p140 = scmp.le.s32.totalorder 1, %s15
      %p141 = scmp.lt.s32.totalorder %s15, 3
      %p142 = pnand %p140, %p141
      %p143 = pneg %p142
      // Predicated region
      $region9: #{tpu_custom_call.1} parent=5 // pred_check
        _
      $region10: #{tpu_custom_call.1} parent=5 // pred_check_branch
        %145 = sbr.rel (%p142) target = $region12
      $region11: #{tpu_custom_call.1} parent=5 // pred_region
        %s146 = ssub.s32 %s15, 1
        // Predicated region
        $region13: #{tpu_custom_call.1} parent=11 // pred_check
          %p147 = pneg %p106
        $region14: #{tpu_custom_call.1} parent=11 // pred_check_branch
          %149 = sbr.rel (%p147) target = $region16
        $region15: #{tpu_custom_call.1} parent=11 // pred_region
          _
        $region16: #{tpu_custom_call.1} parent=11 // pred_fallthru
          _
      $region12: #{tpu_custom_call.1} parent=5 // pred_fallthru
        _
      %p150 = scmp.lt.s32.totalorder %s15, 2
      // Predicated region
      $region17: #{tpu_custom_call.1} parent=5 // pred_check
        %p151 = pneg %p150
      $region18: #{tpu_custom_call.1} parent=5 // pred_check_branch
        %153 = sbr.rel (%p151) target = $region20
      $region19: #{tpu_custom_call.1} parent=5 // pred_region
        // Predicated region
        $region21: #{tpu_custom_call.1} parent=19 // pred_check
          %p154 = pneg %p49
        $region22: #{tpu_custom_call.1} parent=19 // pred_check_branch
          %156 = sbr.rel (%p154) target = $region24
        $region23: #{tpu_custom_call.1} parent=19 // pred_region
          %s157 = sand.u32 %s39, 1
          %s158 = scalar_lea.sflag [#allocation4], %s157
          %s159 = sand.u32 %s39, 1
          %s160 = smul.addr %s159, 2
          %s161 = scalar_lea.vmem [#allocation3], %s160
          %s163 = ssub.s32 32, 32
          %164 = vsyncadd %s158, %s163
          %s165 = smul.addr %s22, 2
          %s166 = sadd.s32 %s23, %s165
          %s167 = smul.addr %s166, 32
          %s168 = scalar_lea.hbm %s0, %s167
          %s170 = sshll.u32 %s161, 4
          %s171 = int_to_ptr.vmem [resolvable:$true] %s170
          %173 = dma.hbm_to_vmem [thread:$0]  %s168, 32, %s171, %s158
        $region24: #{tpu_custom_call.1} parent=19 // pred_fallthru
          _
        // Predicated region
        $region25: #{tpu_custom_call.1} parent=19 // pred_check
          %p174 = pneg %p79
        $region26: #{tpu_custom_call.1} parent=19 // pred_check_branch
          %176 = sbr.rel (%p174) target = $region28
        $region27: #{tpu_custom_call.1} parent=19 // pred_region
          %s177 = sand.u32 %s69, 1
          %s178 = scalar_lea.sflag [#allocation6], %s177
          %s179 = sand.u32 %s69, 1
          %s180 = smul.addr %s179, 2
          %s181 = scalar_lea.vmem [#allocation5], %s180
          %s182 = sadd.s32 %s23, 1
          %s184 = ssub.s32 32, 32
          %185 = vsyncadd %s178, %s184
          %s186 = smul.addr %s22, 2
          %s187 = sadd.s32 %s182, %s186
          %s188 = smul.addr %s187, 32
          %s189 = scalar_lea.hbm %s1, %s188
          %s191 = sshll.u32 %s181, 4
          %s192 = int_to_ptr.vmem [resolvable:$true] %s191
          %194 = dma.hbm_to_vmem [thread:$0]  %s189, 32, %s192, %s178
        $region28: #{tpu_custom_call.1} parent=19 // pred_fallthru
          _
      $region20: #{tpu_custom_call.1} parent=5 // pred_fallthru
        _
      %p195 = scmp.le.s32.totalorder 1, %s15
      %p196 = scmp.lt.s32.totalorder %s15, 3
      %p197 = pnand %p195, %p196
      %p198 = pneg %p197
      // Predicated region
      $region29: #{tpu_custom_call.1} parent=5 // pred_check
        _
      $region30: #{tpu_custom_call.1} parent=5 // pred_check_branch
        %200 = sbr.rel (%p197) target = $region32
      $region31: #{tpu_custom_call.1} parent=5 // pred_region
        %s201 = ssub.s32 %s15, 1
        %s202 = sand.u32 %s42, 1
        %s203 = scalar_lea.sflag [#allocation4], %s202
        %s204 = sand.u32 %s42, 1
        %s205 = smul.addr %s204, 2
        %s206 = scalar_lea.vmem [#allocation3], %s205
        // Predicated region
        $region33: #{tpu_custom_call.1} parent=31 // pred_check
          %p207 = pneg %p55
        $region34: #{tpu_custom_call.1} parent=31 // pred_check_branch
          %209 = sbr.rel (%p207) target = $region36
        $region35: #{tpu_custom_call.1} parent=31 // pred_region
          %210 = dma.done %s203, 32
        $region36: #{tpu_custom_call.1} parent=31 // pred_fallthru
          _
        %s211 = sand.u32 %s72, 1
        %s212 = scalar_lea.sflag [#allocation6], %s211
        %s213 = sand.u32 %s72, 1
        %s214 = smul.addr %s213, 2
        %s215 = scalar_lea.vmem [#allocation5], %s214
        // Predicated region
        $region37: #{tpu_custom_call.1} parent=31 // pred_check
          %p216 = pneg %p85
        $region38: #{tpu_custom_call.1} parent=31 // pred_check_branch
          %218 = sbr.rel (%p216) target = $region40
        $region39: #{tpu_custom_call.1} parent=31 // pred_region
          %219 = dma.done %s212, 32
        $region40: #{tpu_custom_call.1} parent=31 // pred_fallthru
          _
        %s220 = sand.u32 %s42, 1
        %s221 = scalar_lea.sflag [#allocation4], %s220
        %s222 = sand.u32 %s42, 1
        %s223 = smul.addr %s222, 2
        %s224 = scalar_lea.vmem [#allocation3], %s223
        %p225 = pneg %p55
        %p226 = pneg %p52
        %s227 = sand.u32 %s72, 1
        %s228 = scalar_lea.sflag [#allocation6], %s227
        %s229 = sand.u32 %s72, 1
        %s230 = smul.addr %s229, 2
        %s231 = scalar_lea.vmem [#allocation5], %s230
        %p232 = pneg %p85
        %p233 = pneg %p82
        %p234 = pneg %p106
        %p235 = pneg %p103
        %p236 = pneg %p132
        %p237 = pneg %p129
        %p238 = scmp.lt.s32.totalorder %s24, 1
        %s239 = scalar_select %p238, %s24, 1
        %s240 = smul.addr %s239, 8
        %s241 = scalar_lea.vmem %s3, %s240
        %s242 = sadd.s32 %s25, 1
        %p243 = scmp.lt.s32.totalorder %s24, 1
        %s244 = scalar_select %p243, %s24, 1
        %s245 = smul.addr %s244, 8
        %s246 = scalar_lea.vmem %s3, %s245
        %p248 = scmp.eq.s32.totalorder %s25, 0
        // Predicated region
        $region41: #{tpu_custom_call.1} parent=31 // pred_check
          %p249 = pneg %p248
        $region42: #{tpu_custom_call.1} parent=31 // pred_check_branch
          %251 = sbr.rel (%p249) target = $region44
        $region43: #{tpu_custom_call.1} parent=31 // pred_region
          %vm252 = vcmask 15360
          %253 = vst.msk [vmem:[%s246] sm:$0xff] %vm252, 0.0
        $region44: #{tpu_custom_call.1} parent=31 // pred_fallthru
          _
        %v254 = vld [vmem:[%s206] sm:$0x3]
        %255 = vst [vmem:[#allocation2] sm:$0x3] %v254
        %v256 = vld [vmem:[%s215] sm:$0x3]
        %v258 = vcombine.low %v254, %v254
        %v260 = vunpack.c.l.s4 1983009808
        %v261 = vunpack.c.0.s8 %v260
        %v262 = vlaneseq
        %v263 = vshrl.u32 %v262, 7
        %v264 = vsub.s32 %v261, %v263
        %v265 = vrot.slane %v258, %v264
        %266 = vrot.lane.b32.xlu0 %v265, 127
        %v267 = vpop.permute.xlu0 %266
        %vm269 = vcmask 1035266
        %270 = vst.msk [vmem:[#allocation2] sm:$0xc] %vm269, %v267
        %v272 = vcombine.low %v256, %v256
        %v274 = vunpack.c.l.s4 1983009808
        %v275 = vunpack.c.0.s8 %v274
        %v276 = vlaneseq
        %v277 = vshrl.u32 %v276, 7
        %v278 = vsub.s32 %v275, %v277
        %v279 = vrot.slane %v272, %v278
        %280 = vrot.lane.b32.xlu0 %v279, 127
        %v281 = vpop.permute.xlu0 %280
        %vm283 = vcmask 1044474
        %284 = vst.msk [vmem:[#allocation2] sm:$0xc] %vm283, %v281
        %v286 = vunpack.c.l.s4 1983009808
        %v287 = vunpack.c.0.s8 %v286
        %v288 = vlaneseq
        %v289 = vshrl.u32 %v288, 7
        %v290 = vsub.s32 %v287, %v289
        %v291 = vrot.slane %v254, %v290
        %292 = vrot.lane.b32.xlu0 %v291, 126
        %v293 = vpop.permute.xlu0 %292
        %vm295 = vcmask 1025024
        %296 = vst.msk [vmem:[#allocation2 + $0x4] sm:$0x3] %vm295, %v293
        %v298 = vunpack.c.l.s4 1983009808
        %v299 = vunpack.c.0.s8 %v298
        %v300 = vlaneseq
        %v301 = vshrl.u32 %v300, 7
        %v302 = vsub.s32 %v299, %v301
        %v303 = vrot.slane %v256, %v302
        %304 = vrot.lane.b32.xlu0 %v303, 126
        %v305 = vpop.permute.xlu0 %304
        %vm307 = vcmask 1042416
        %308 = vst.msk [vmem:[#allocation2 + $0x4] sm:$0x3] %vm307, %v305
        %v309 = vld [vmem:[%s2] sm:$0xf]
        %v310 = vld [vmem:[#allocation2] sm:$0xf]
        %v311 = vld [vmem:[#allocation2 + $0x4] sm:$0x3]
        %v314 = vunpack.c.l.b16 %v310
        %v315 = vunpack.c.l.b16 %v311
        %v316 = vpack.c.b16 %v315, %v314
        %vm317 = vcmask 97280
        %v319 = vsel %vm317, %v309, 0
        %vm321 = vcmask 1045504
        %v323 = vsel %vm321, %v316, 0
        %325 = vmatprep.subr.bf16.mxu0 0
        %326 = vmatpush1.bf16.msra.mxu0 %v323
        %327 = vmatprep.subr.bf16.mxu0 0
        %328 = vmatpush1.bf16.msra.mxu0 0
        %329 = vmatprep.subr.bf16.mxu0 0
        %330 = vmatpush1.bf16.msra.mxu0 0
        %331 = vmatprep.subr.bf16.mxu0 0
        %332 = vmatpush1.bf16.msra.mxu0 0
        %333 = vmatprep.subr.bf16.mxu0 0
        %334 = vmatpush1.bf16.msra.mxu0 0
        %335 = vmatprep.subr.bf16.mxu0 0
        %336 = vmatpush1.bf16.msra.mxu0 0
        %337 = vmatprep.subr.bf16.mxu0 0
        %338 = vmatpush1.bf16.msra.mxu0 0
        %339 = vmatprep.subr.bf16.mxu0 0
        %340 = vmatpush1.bf16.msra.mxu0 0
        %341 = vmatprep.subr.bf16.mxu0 0
        %342 = vmatpush1.bf16.msra.mxu0 0
        %343 = vmatprep.subr.bf16.mxu0 0
        %344 = vmatpush1.bf16.msra.mxu0 0
        %345 = vmatprep.subr.bf16.mxu0 0
        %346 = vmatpush1.bf16.msra.mxu0 0
        %347 = vmatprep.subr.bf16.mxu0 0
        %348 = vmatpush1.bf16.msra.mxu0 0
        %349 = vmatprep.subr.bf16.mxu0 0
        %350 = vmatpush1.bf16.msra.mxu0 0
        %351 = vmatprep.subr.bf16.mxu0 0
        %352 = vmatpush1.bf16.msra.mxu0 0
        %353 = vmatprep.subr.bf16.mxu0 0
        %354 = vmatpush1.bf16.msra.mxu0 0
        %355 = vmatprep.subr.bf16.mxu0 0
        %356 = vmatpush1.bf16.msra.mxu0 0
        %357 = vmatprep.mubr.bf16.mxu0 0
        %358 = vmatmul.mubr.bf16.gmra.mrb[0].mxu0 %v319
        %v359 = vpop.f32.mrb[0].mxu0
        %v360 = vadd.f32 0.0, %v359
        %v361 = vpop.f32.mrb[0].mxu0
        %v362 = vpop.f32.mrb[0].mxu0
        %v363 = vpop.f32.mrb[0].mxu0
        %364 = vdwg.mxu0
        %p365 = scmp.ne.s32.totalorder %s25, 0
        // Predicated region
        $region45: #{tpu_custom_call.1} parent=31 // pred_check
          %p366 = pneg %p365
        $region46: #{tpu_custom_call.1} parent=31 // pred_check_branch
          %368 = sbr.rel (%p366) target = $region48
        $region47: #{tpu_custom_call.1} parent=31 // pred_region
          %v369 = vld [vmem:[%s246] sm:$0xff]
          %370 = vadd.xlane.f32.xlu0 %v360
          %v371 = vpop.xlane.xlu0 %370
          %v372 = vadd.f32 %v369, %v371
          %vm373 = vcmask 7168
          %374 = vst.msk [vmem:[%s246] sm:$0xff] %vm373, %v372
          %v375 = vld [vmem:[%s246] sm:$0xff]
          %v376 = vmul.f32 %v360, %v360
          %377 = vadd.xlane.f32.xlu0 %v376
          %v378 = vpop.xlane.xlu0 %377
          %v379 = vadd.f32 %v375, %v378
          %vm380 = vcmask 15368
          %381 = vst.msk [vmem:[%s246] sm:$0xff] %vm380, %v379
        $region48: #{tpu_custom_call.1} parent=31 // pred_fallthru
          _
        // Predicated region
        $region49: #{tpu_custom_call.1} parent=31 // pred_check
          %p382 = pneg %p248
        $region50: #{tpu_custom_call.1} parent=31 // pred_check_branch
          %384 = sbr.rel (%p382) target = $region52
        $region51: #{tpu_custom_call.1} parent=31 // pred_region
          %v385 = vlaneseq
          %v386 = vand.u32 %v385, 127
          %vm387 = vcmp.lt.s32.totalorder %v386, 16
          %v388 = vsel %vm387, %v360, 0.0
          %v389 = vld [vmem:[%s246] sm:$0xff]
          %390 = vadd.xlane.f32.xlu0 %v388
          %v391 = vpop.xlane.xlu0 %390
          %v392 = vadd.f32 %v389, %v391
          %vm393 = vcmask 7168
          %394 = vst.msk [vmem:[%s246] sm:$0xff] %vm393, %v392
          %v395 = vld [vmem:[%s246] sm:$0xff]
          %v396 = vmul.f32 %v388, %v388
          %397 = vadd.xlane.f32.xlu0 %v396
          %v398 = vpop.xlane.xlu0 %397
          %v399 = vadd.f32 %v395, %v398
          %vm400 = vcmask 15368
          %401 = vst.msk [vmem:[%s246] sm:$0xff] %vm400, %v399
        $region52: #{tpu_custom_call.1} parent=31 // pred_fallthru
          _
        %p402 = scmp.lt.s32.totalorder %s24, 1
        %s403 = scalar_select %p402, %s24, 1
        %s404 = smul.addr %s403, 8
        %s405 = scalar_lea.vmem %s3, %s404
        // Predicated region
        $region53: #{tpu_custom_call.1} parent=31 // pred_check
          %p406 = pneg %p129
        $region54: #{tpu_custom_call.1} parent=31 // pred_check_branch
          %408 = sbr.rel (%p406) target = $region56
        $region55: #{tpu_custom_call.1} parent=31 // pred_region
          _
        $region56: #{tpu_custom_call.1} parent=31 // pred_fallthru
          _
      $region32: #{tpu_custom_call.1} parent=5 // pred_fallthru
        _
      %p409 = scmp.le.s32.totalorder 2, %s15
      // Predicated region
      $region57: #{tpu_custom_call.1} parent=5 // pred_check
        %p410 = pneg %p409
      $region58: #{tpu_custom_call.1} parent=5 // pred_check_branch
        %412 = sbr.rel (%p410) target = $region60
      $region59: #{tpu_custom_call.1} parent=5 // pred_region
        %s413 = ssub.s32 %s15, 2
        // Predicated region
        $region61: #{tpu_custom_call.1} parent=59 // pred_check
          %p414 = pneg %p135
        $region62: #{tpu_custom_call.1} parent=59 // pred_check_branch
          %416 = sbr.rel (%p414) target = $region64
        $region63: #{tpu_custom_call.1} parent=59 // pred_region
          %p417 = scmp.lt.s32.totalorder %s26, 1
          %s418 = scalar_select %p417, %s26, 1
          %s419 = smul.addr %s418, 8
          %s420 = scalar_lea.vmem %s3, %s419
        $region64: #{tpu_custom_call.1} parent=59 // pred_fallthru
          _
      $region60: #{tpu_custom_call.1} parent=5 // pred_fallthru
        _
    $region6: #{tpu_custom_call.1} parent=1 // loop_footer
      %s19 = sadd.s32 1, %s15
    $region7: #{tpu_custom_call.1} parent=1 // loop_footer_branch
      %14 = sbr.rel target = $region3
    $region8: #{tpu_custom_call.1} parent=1 // loop_exit
      _
    %421 = vsyncpa [#allocation4], 1
    %s422 = scalar_lea.sflag [#allocation4], 1
    %423 = vsyncpa %s422, 1
    %424 = vsyncpa [#allocation6], 1
    %s425 = scalar_lea.sflag [#allocation6], 1
    %426 = vsyncpa %s425, 1

</llo_original>
